<compile_context>
chip_gen: v7x
topology: tpu7x:2x2x1
jax: 0.10.0
libtpu: 0.0.40
codegen_flags: <defaults>
</compile_context>

<pallas_src>
import functools

import jax
import jax.numpy as jnp
from jax.experimental import pallas as pl
from jax.experimental.pallas import tpu as pltpu


def _round_up(x, m):
    return ((x + m - 1) // m) * m


def _cdiv(a, b):
    return (a + b - 1) // b


def actor_critic_kernel(x_ref, w1_ref, b1_ref, w2_ref, b2_ref, out_ref, *,
                        num_actions):
    out_lanes = out_ref.shape[-1]

    # ---- fused layer 1: [actor_hidden | critic_hidden], one 2H-wide matmul ----
    h = jnp.dot(x_ref[...], w1_ref[...],
                preferred_element_type=jnp.float32) + b1_ref[...]
    h = jnp.maximum(h, 0.0)  # elementwise ReLU is identical on the fused hidden

    # ---- fused layer 2: block-diagonal weight -> [logits | value | zeros] ----
    z = jnp.dot(h.astype(w2_ref.dtype), w2_ref[...],
                preferred_element_type=jnp.float32) + b2_ref[...]

    # lane masks built once at (1, out_lanes); broadcast over the batch rows
    lane = jax.lax.broadcasted_iota(jnp.int32, (1, out_lanes), 1)
    is_logit = lane < num_actions
    value_onehot = (lane == num_actions).astype(jnp.float32)

    # masked softmax over the first `num_actions` lanes only
    masked = jnp.where(is_logit, z, jnp.float32(-1e30))
    m = jnp.max(masked, axis=-1, keepdims=True)
    # keep the select for e: exp on non-logit lanes may be huge; select discards it
    e = jnp.where(is_logit, jnp.exp(z - m), 0.0)
    denom = jnp.sum(e, axis=-1, keepdims=True)
    probs = e / denom  # exact divide: probs sum to 1, negligible cost

    # lane-dense output slab: probs in [0, A) (already zero elsewhere),
    # critic value added at lane A
    out_ref[...] = probs + z * value_onehot


def actor_critic_forward(state, params, *, block_batch=1024,
                         matmul_dtype=jnp.bfloat16):
    """state: (B, input_dim) f32. params: dict of weights/biases.

    Returns (probs (B, A), value (B, 1)) — same semantics as ActorCritic.forward.
    """
    state = jnp.asarray(state, jnp.float32)
    B, D = state.shape
    H = params["w1a"].shape[1]
    A = params["w2a"].shape[1]
    two_h = 2 * H
    out_lanes = _round_up(A + 1, 128)

    # ---- pack / fuse parameters (outside the kernel, once) ----
    w1 = jnp.concatenate([params["w1a"], params["w1c"]], axis=1)       # (D, 2H)
    b1 = jnp.concatenate([params["b1a"], params["b1c"]], axis=1)       # (1, 2H)
    w2 = jnp.zeros((two_h, out_lanes), jnp.float32)
    w2 = w2.at[:H, :A].set(params["w2a"])                              # actor block
    w2 = w2.at[H:, A].set(params["w2c"][:, 0])                         # critic column
    b2 = jnp.zeros((1, out_lanes), jnp.float32)
    b2 = b2.at[0, :A].set(params["b2a"][0])
    b2 = b2.at[0, A].set(params["b2c"][0, 0])

    # MXU operands in matmul_dtype (bf16 by default); biases stay f32
    w1 = w1.astype(matmul_dtype)
    w2 = w2.astype(matmul_dtype)
    x = state.astype(matmul_dtype)

    # ---- batch tiling ----
    # sublane multiple: 8 for f32, 16 for packed bf16 tiles
    row_mult = 8 if jnp.dtype(matmul_dtype).itemsize >= 4 else 16
    n_steps = max(1, _cdiv(B, block_batch))
    # v7x megacore: make sure ("parallel",) has >=2 grid steps to shard across
    # both TensorCores for moderate batches (harmless single extra step elsewhere)
    if n_steps < 2 and B >= 64:
        n_steps = 2
    tb = _round_up(_cdiv(B, n_steps), row_mult)   # minimal pad waste
    b_pad = n_steps * tb
    if b_pad != B:
        x = jnp.pad(x, ((0, b_pad - B), (0, 0)))

    kernel = functools.partial(actor_critic_kernel, num_actions=A)

    # Tile footprint (double-buffered x + out tiles, resident weights) stays far
    # under every generation's scoped-VMEM default for block_batch <= 2048, so
    # we keep the default vmem limit.
    out = pl.pallas_call(
        kernel,
        out_shape=jax.ShapeDtypeStruct((b_pad, out_lanes), jnp.float32),
        grid=(n_steps,),
        in_specs=[
            pl.BlockSpec((tb, D), lambda i: (i, 0)),              # x: batch-tiled
            pl.BlockSpec((D, two_h), lambda i: (0, 0)),           # fused W1 (resident)
            pl.BlockSpec((1, two_h), lambda i: (0, 0)),           # fused b1
            pl.BlockSpec((two_h, out_lanes), lambda i: (0, 0)),   # block-diag W2
            pl.BlockSpec((1, out_lanes), lambda i: (0, 0)),       # fused b2
        ],
        out_specs=pl.BlockSpec((tb, out_lanes), lambda i: (i, 0)),
        compiler_params=pltpu.CompilerParams(
            dimension_semantics=("parallel",)),
    )(x, w1, b1, w2, b2)

    probs = out[:B, :A]
    value = out[:B, A:A + 1]
    return probs, value


def init_params(key, input_dim, output_dim, hidden_dim=64):
    """Deterministic PyTorch-Linear-style init (uniform +-1/sqrt(fan_in))."""
    ks = jax.random.split(key, 8)

    def lin(kw, kb, fan_in, fan_out):
        bound = 1.0 / jnp.sqrt(jnp.float32(fan_in))
        w = jax.random.uniform(kw, (fan_in, fan_out), jnp.float32, -bound, bound)
        b = jax.random.uniform(kb, (1, fan_out), jnp.float32, -bound, bound)
        return w, b

    w1a, b1a = lin(ks[0], ks[1], input_dim, hidden_dim)
    w2a, b2a = lin(ks[2], ks[3], hidden_dim, output_dim)
    w1c, b1c = lin(ks[4], ks[5], input_dim, hidden_dim)
    w2c, b2c = lin(ks[6], ks[7], hidden_dim, 1)
    return dict(w1a=w1a, b1a=b1a, w2a=w2a, b2a=b2a,
                w1c=w1c, b1c=b1c, w2c=w2c, b2c=b2c)


def reference_forward(state, p):
    h_a = jnp.maximum(state @ p["w1a"] + p["b1a"], 0.0)
    probs = jax.nn.softmax(h_a @ p["w2a"] + p["b2a"], axis=-1)
    h_c = jnp.maximum(state @ p["w1c"] + p["b1c"], 0.0)
    value = h_c @ p["w2c"] + p["b2c"]
    return probs, value


# TODO(synk): get_action (Categorical sampling), update() (Adam step, losses) and
# compute_returns are host/training-side logic, not part of the forward kernel.

if __name__ == "__main__":
    key = jax.random.PRNGKey(0)
    k_param, k1, k2, k3 = jax.random.split(key, 4)

    B, INPUT_DIM, OUTPUT_DIM, HIDDEN = 8, 32, 4, 64
    params = init_params(k_param, INPUT_DIM, OUTPUT_DIM, HIDDEN)

    # ---- case 1: f32 matmul path (exact), tight tolerance ----
    state = jax.random.normal(k1, (B, INPUT_DIM), jnp.float32)
    probs, value = jax.block_until_ready(
        actor_critic_forward(state, params, matmul_dtype=jnp.float32))
    ref_probs, ref_value = reference_forward(state, params)
    assert probs.shape == (B, OUTPUT_DIM) and value.shape == (B, 1)
    assert jnp.allclose(probs, ref_probs, atol=1e-4, rtol=1e-4)
    assert jnp.allclose(value, ref_value, atol=1e-4, rtol=1e-4)
    assert jnp.allclose(jnp.sum(probs, axis=-1), 1.0, atol=1e-5)

    # ---- case 2: default bf16 MXU operands (f32 accumulate / softmax) ----
    probs_b, value_b = jax.block_until_ready(actor_critic_forward(state, params))
    assert probs_b.shape == (B, OUTPUT_DIM) and value_b.shape == (B, 1)
    assert jnp.allclose(probs_b, ref_probs, atol=2e-2, rtol=2e-2)
    assert jnp.allclose(value_b, ref_value, atol=2e-2, rtol=2e-2)
    assert jnp.allclose(jnp.sum(probs_b, axis=-1), 1.0, atol=1e-5)

    # ---- case 3: ragged batch (exercises the pad-and-slice path) ----
    B2 = 10
    state2 = jax.random.normal(k2, (B2, INPUT_DIM), jnp.float32)
    probs2, value2 = jax.block_until_ready(actor_critic_forward(state2, params))
    ref_probs2, ref_value2 = reference_forward(state2, params)
    assert probs2.shape == (B2, OUTPUT_DIM) and value2.shape == (B2, 1)
    assert jnp.allclose(probs2, ref_probs2, atol=2e-2, rtol=2e-2)
    assert jnp.allclose(value2, ref_value2, atol=2e-2, rtol=2e-2)
    assert jnp.allclose(jnp.sum(probs2, axis=-1), 1.0, atol=1e-5)

    # ---- case 4: multi-step grid (forced >=2 steps for megacore) + padding ----
    B3 = 72
    state3 = jax.random.normal(k3, (B3, INPUT_DIM), jnp.float32)
    probs3, value3 = jax.block_until_ready(actor_critic_forward(state3, params))
    ref_probs3, ref_value3 = reference_forward(state3, params)
    assert probs3.shape == (B3, OUTPUT_DIM) and value3.shape == (B3, 1)
    assert jnp.allclose(probs3, ref_probs3, atol=2e-2, rtol=2e-2)
    assert jnp.allclose(value3, ref_value3, atol=2e-2, rtol=2e-2)
    assert jnp.allclose(jnp.sum(probs3, axis=-1), 1.0, atol=1e-5)

    print("KERNEL_OK")
</pallas_src>

<mosaic_0001>
module attributes {stable_mosaic.version = 11 : i64} {
  func.func @actor_critic_kernel(%arg0: i32, %arg1: memref<8x32xf32, #tpu.memory_space<vmem>>, %arg2: memref<32x128xf32, #tpu.memory_space<vmem>>, %arg3: memref<1x128xf32, #tpu.memory_space<vmem>>, %arg4: memref<128x128xf32, #tpu.memory_space<vmem>>, %arg5: memref<1x128xf32, #tpu.memory_space<vmem>>, %arg6: memref<8x128xf32, #tpu.memory_space<vmem>>) attributes {dimension_semantics = [#tpu.dimension_semantics<parallel>], iteration_bounds = array<i64: 1>, scalar_prefetch = 0 : i64, scratch_operands = 0 : i64, tpu.core_type = #tpu.core_type<tc>, window_params = [{transform_indices = @transform_0, window_bounds = array<i64: 8, 32>}, {pipeline_mode = #tpu.pipeline_mode<synchronous>, transform_indices = @transform_1, window_bounds = array<i64: 32, 128>}, {pipeline_mode = #tpu.pipeline_mode<synchronous>, transform_indices = @transform_2, window_bounds = array<i64: 1, 128>}, {pipeline_mode = #tpu.pipeline_mode<synchronous>, transform_indices = @transform_3, window_bounds = array<i64: 128, 128>}, {pipeline_mode = #tpu.pipeline_mode<synchronous>, transform_indices = @transform_4, window_bounds = array<i64: 1, 128>}, {transform_indices = @transform_5, window_bounds = array<i64: 8, 128>}]} {
    %c0 = arith.constant 0 : index
    %c0_0 = arith.constant 0 : index
    %0 = vector.load %arg1[%c0, %c0_0] : memref<8x32xf32, #tpu.memory_space<vmem>>, vector<8x32xf32>
    %c0_1 = arith.constant 0 : index
    %c0_2 = arith.constant 0 : index
    %1 = vector.load %arg2[%c0_1, %c0_2] : memref<32x128xf32, #tpu.memory_space<vmem>>, vector<32x128xf32>
    %cst = arith.constant dense<0.000000e+00> : vector<8x128xf32>
    %2 = tpu.matmul %0, %1, %cst {dimension_numbers = #tpu.dot_dimension_numbers<[1], [0], [0], [1], [0, 0, 1, 1], [], []>} : vector<8x32xf32>, vector<32x128xf32>, vector<8x128xf32> -> vector<8x128xf32>
    %c0_3 = arith.constant 0 : index
    %c0_4 = arith.constant 0 : index
    %3 = vector.load %arg3[%c0_3, %c0_4] : memref<1x128xf32, #tpu.memory_space<vmem>>, vector<1x128xf32>
    %4 = vector.broadcast %3 : vector<1x128xf32> to vector<8x128xf32>
    %5 = arith.addf %2, %4 : vector<8x128xf32>
    %cst_5 = arith.constant 0.000000e+00 : f32
    %6 = vector.broadcast %cst_5 : f32 to vector<8x128xf32>
    %7 = arith.maximumf %5, %6 : vector<8x128xf32>
    %c0_6 = arith.constant 0 : index
    %c0_7 = arith.constant 0 : index
    %8 = vector.load %arg4[%c0_6, %c0_7] : memref<128x128xf32, #tpu.memory_space<vmem>>, vector<128x128xf32>
    %cst_8 = arith.constant dense<0.000000e+00> : vector<8x128xf32>
    %9 = tpu.matmul %7, %8, %cst_8 {dimension_numbers = #tpu.dot_dimension_numbers<[1], [0], [0], [1], [0, 0, 1, 1], [], []>} : vector<8x128xf32>, vector<128x128xf32>, vector<8x128xf32> -> vector<8x128xf32>
    %c0_9 = arith.constant 0 : index
    %c0_10 = arith.constant 0 : index
    %10 = vector.load %arg5[%c0_9, %c0_10] : memref<1x128xf32, #tpu.memory_space<vmem>>, vector<1x128xf32>
    %11 = vector.broadcast %10 : vector<1x128xf32> to vector<8x128xf32>
    %12 = arith.addf %9, %11 : vector<8x128xf32>
    %13 = tpu.iota {dimensions = array<i32: 1>} : vector<1x128xi32>
    %c4_i32 = arith.constant 4 : i32
    %14 = vector.broadcast %c4_i32 : i32 to vector<1x128xi32>
    %15 = arith.cmpi slt, %13, %14 : vector<1x128xi32>
    %c4_i32_11 = arith.constant 4 : i32
    %16 = vector.broadcast %c4_i32_11 : i32 to vector<1x128xi32>
    %17 = arith.cmpi eq, %13, %16 : vector<1x128xi32>
    %18 = arith.extui %17 : vector<1x128xi1> to vector<1x128xi32>
    %19 = arith.sitofp %18 : vector<1x128xi32> to vector<1x128xf32>
    %cst_12 = arith.constant -1.000000e+30 : f32
    %20 = vector.shape_cast %15 : vector<1x128xi1> to vector<1x128xi1>
    %21 = vector.broadcast %20 : vector<1x128xi1> to vector<8x128xi1>
    %22 = vector.broadcast %cst_12 : f32 to vector<8x128xf32>
    %23 = arith.select %21, %12, %22 : vector<8x128xi1>, vector<8x128xf32>
    %cst_13 = arith.constant dense<0xFF800000> : vector<8xf32>
    %24 = vector.multi_reduction <maximumf>, %23, %cst_13 [1] : vector<8x128xf32> to vector<8xf32>
    %25 = vector.shape_cast %24 : vector<8xf32> to vector<8x1xf32>
    %26 = vector.broadcast %25 : vector<8x1xf32> to vector<8x128xf32>
    %27 = arith.subf %12, %26 : vector<8x128xf32>
    %28 = math.exp %27 : vector<8x128xf32>
    %cst_14 = arith.constant 0.000000e+00 : f32
    %29 = vector.shape_cast %15 : vector<1x128xi1> to vector<1x128xi1>
    %30 = vector.broadcast %29 : vector<1x128xi1> to vector<8x128xi1>
    %31 = vector.broadcast %cst_14 : f32 to vector<8x128xf32>
    %32 = arith.select %30, %28, %31 : vector<8x128xi1>, vector<8x128xf32>
    %cst_15 = arith.constant dense<0.000000e+00> : vector<8xf32>
    %33 = vector.multi_reduction <add>, %32, %cst_15 [1] : vector<8x128xf32> to vector<8xf32>
    %34 = vector.shape_cast %33 : vector<8xf32> to vector<8x1xf32>
    %35 = vector.broadcast %34 : vector<8x1xf32> to vector<8x128xf32>
    %36 = arith.divf %32, %35 : vector<8x128xf32>
    %37 = vector.broadcast %19 : vector<1x128xf32> to vector<8x128xf32>
    %38 = arith.mulf %12, %37 : vector<8x128xf32>
    %39 = arith.addf %36, %38 : vector<8x128xf32>
    %c0_16 = arith.constant 0 : index
    %c0_17 = arith.constant 0 : index
    %40 = vector.load %arg6[%c0_16, %c0_17] : memref<8x128xf32, #tpu.memory_space<vmem>>, vector<8x128xf32>
    tpu.vector_store %arg6[%c0_16, %c0_17], %39 {strides = array<i32>} : memref<8x128xf32, #tpu.memory_space<vmem>>, vector<8x128xf32>,
    return
  }
  func.func @transform_0(%arg0: i32) -> (i32, i32) {
    %c0_i32 = arith.constant 0 : i32
    %c0_i32_0 = arith.constant 0 : i32
    return %arg0, %c0_i32 : i32, i32
  }
  func.func @transform_1(%arg0: i32) -> (i32, i32) {
    %c0_i32 = arith.constant 0 : i32
    %c0_i32_0 = arith.constant 0 : i32
    %c0_i32_1 = arith.constant 0 : i32
    return %c0_i32, %c0_i32_0 : i32, i32
  }
  func.func @transform_2(%arg0: i32) -> (i32, i32) {
    %c0_i32 = arith.constant 0 : i32
    %c0_i32_0 = arith.constant 0 : i32
    %c0_i32_1 = arith.constant 0 : i32
    return %c0_i32, %c0_i32_0 : i32, i32
  }
  func.func @transform_3(%arg0: i32) -> (i32, i32) {
    %c0_i32 = arith.constant 0 : i32
    %c0_i32_0 = arith.constant 0 : i32
    %c0_i32_1 = arith.constant 0 : i32
    return %c0_i32, %c0_i32_0 : i32, i32
  }
  func.func @transform_4(%arg0: i32) -> (i32, i32) {
    %c0_i32 = arith.constant 0 : i32
    %c0_i32_0 = arith.constant 0 : i32
    %c0_i32_1 = arith.constant 0 : i32
    return %c0_i32, %c0_i32_0 : i32, i32
  }
  func.func @transform_5(%arg0: i32) -> (i32, i32) {
    %c0_i32 = arith.constant 0 : i32
    %c0_i32_0 = arith.constant 0 : i32
    return %arg0, %c0_i32 : i32, i32
  }
}

</mosaic_0001>

<llo_original>
// kernel: tpu_custom_call.1
$region0: #{tpu_custom_call.1}
  #allocation0 [shape = 'u32[]', space=smem, size = 0x4, offset = 0x4, fixed_abs, tag = 'smem constant byte address 0x4 - core index']
  #allocation1 [shape = 'u32[144,128]{1,0:T(1,128)}', space=vmem, size = 0x12000, scoped, tag = 'internal scratch']
  %s0 = inlined_call_operand.hbm [shape: f32[8,32], index: 0, kind: input, shape index: {}]
  %s1 = inlined_call_operand.hbm [shape: f32[32,128], index: 1, kind: input, shape index: {}]
  %s2 = inlined_call_operand.vmem [shape: f32[1,128], index: 2, kind: input, shape index: {}]
  %s3 = inlined_call_operand.hbm [shape: f32[128,128], index: 3, kind: input, shape index: {}]
  %s4 = inlined_call_operand.vmem [shape: f32[1,128], index: 4, kind: input, shape index: {}]
  %s5 = inlined_call_operand.hbm [shape: f32[8,128], index: 5, kind: output, shape index: {}]
  %s6 = sld [smem:[#allocation0]]
  $region42: #{tpu_custom_call.1} parent=0
    _
  %s8 = ssub.s32 1, %s6
  %s9 = scalar_select 0, %s8, %s6
  $region1: #{tpu_custom_call.1} parent=0
    #allocation2 [shape = 'u8[4096]{0}', space=vmem, size = 0x1000, scoped, tag = 'input window, operand 0, single buffered']
    #allocation3 [shape = 's32[1]{0}', space=sflag, size = 0x4, scoped, tag = 'scoped memory for tpu_custom_call.1']
    #allocation4 [shape = 's32[1]{0}', space=sflag, size = 0x4, scoped, tag = 'scoped memory for tpu_custom_call.1']
    #allocation5 [shape = 'u8[16384]{0}', space=vmem, size = 0x4000, scoped, tag = 'input window, operand 1, single buffered']
    #allocation6 [shape = 's32[1]{0}', space=sflag, size = 0x4, scoped, tag = 'scoped memory for tpu_custom_call.1']
    #allocation7 [shape = 'u8[65536]{0}', space=vmem, size = 0x10000, scoped, tag = 'input window, operand 3, single buffered']
    #allocation8 [shape = 'u8[4096]{0}', space=vmem, size = 0x1000, scoped, tag = 'output window, operand 0, single buffered']
    %10 = vsyncpa [#allocation3], 0
    %11 = vsyncpa [#allocation6], 0
    %12 = vsyncpa [#allocation4], 0
    // Predicated region
    $region2: #{tpu_custom_call.1} parent=1 // pred_check
      _
    $region3: #{tpu_custom_call.1} parent=1 // pred_check_branch
      %14 = sbr.rel (0) target = $region5
    $region4: #{tpu_custom_call.1} parent=1 // pred_region
      %s16 = ssub.s32 128, 128
      %17 = vsyncadd [#allocation3], %s16
      %s19 = sshll.u32 [#allocation2], 4
      %s20 = int_to_ptr.vmem [resolvable:$true] %s19
      %22 = dma.hbm_to_vmem [thread:$0]  %s0, 128, %s20, [#allocation3]
    $region5: #{tpu_custom_call.1} parent=1 // pred_fallthru
      _
    // Predicated region
    $region6: #{tpu_custom_call.1} parent=1 // pred_check
      _
    $region7: #{tpu_custom_call.1} parent=1 // pred_check_branch
      %24 = sbr.rel (0) target = $region9
    $region8: #{tpu_custom_call.1} parent=1 // pred_region
      %s26 = ssub.s32 512, 512
      %27 = vsyncadd [#allocation6], %s26
      %s28 = sshll.u32 [#allocation5], 4
      %s29 = int_to_ptr.vmem [resolvable:$true] %s28
      %34 = dma.hbm_to_vmem [thread:$0]  %s1, 512, %s29, [#allocation6], 128, 128, 8
    $region9: #{tpu_custom_call.1} parent=1 // pred_fallthru
      _
    // Predicated region
    $region10: #{tpu_custom_call.1} parent=1 // pred_check
      _
    $region11: #{tpu_custom_call.1} parent=1 // pred_check_branch
      %36 = sbr.rel (0) target = $region13
    $region12: #{tpu_custom_call.1} parent=1 // pred_region
      _
    $region13: #{tpu_custom_call.1} parent=1 // pred_fallthru
      _
    // Predicated region
    $region14: #{tpu_custom_call.1} parent=1 // pred_check
      _
    $region15: #{tpu_custom_call.1} parent=1 // pred_check_branch
      %38 = sbr.rel (0) target = $region17
    $region16: #{tpu_custom_call.1} parent=1 // pred_region
      %s40 = ssub.s32 2048, 2048
      %41 = vsyncadd [#allocation6], %s40
      %s42 = sshll.u32 [#allocation7], 4
      %s43 = int_to_ptr.vmem [resolvable:$true] %s42
      %48 = dma.hbm_to_vmem [thread:$0]  %s3, 2048, %s43, [#allocation6], 128, 128, 8
    $region17: #{tpu_custom_call.1} parent=1 // pred_fallthru
      _
    // Predicated region
    $region18: #{tpu_custom_call.1} parent=1 // pred_check
      _
    $region19: #{tpu_custom_call.1} parent=1 // pred_check_branch
      %50 = sbr.rel (0) target = $region21
    $region20: #{tpu_custom_call.1} parent=1 // pred_region
      _
    $region21: #{tpu_custom_call.1} parent=1 // pred_fallthru
      _
    // Predicated region
    $region22: #{tpu_custom_call.1} parent=1 // pred_check
      _
    $region23: #{tpu_custom_call.1} parent=1 // pred_check_branch
      %52 = sbr.rel (0) target = $region25
    $region24: #{tpu_custom_call.1} parent=1 // pred_region
      %53 = dma.done [#allocation3], 128
    $region25: #{tpu_custom_call.1} parent=1 // pred_fallthru
      _
    // Predicated region
    $region26: #{tpu_custom_call.1} parent=1 // pred_check
      _
    $region27: #{tpu_custom_call.1} parent=1 // pred_check_branch
      %55 = sbr.rel (0) target = $region29
    $region28: #{tpu_custom_call.1} parent=1 // pred_region
      %56 = dma.done [#allocation6], 512
    $region29: #{tpu_custom_call.1} parent=1 // pred_fallthru
      _
    // Predicated region
    $region30: #{tpu_custom_call.1} parent=1 // pred_check
      _
    $region31: #{tpu_custom_call.1} parent=1 // pred_check_branch
      %58 = sbr.rel (0) target = $region33
    $region32: #{tpu_custom_call.1} parent=1 // pred_region
      %59 = dma.done [#allocation6], 2048
    $region33: #{tpu_custom_call.1} parent=1 // pred_fallthru
      _
    %v60 = vld [vmem:[#allocation2] sm:$0xff]
    %v61 = vld [vmem:[#allocation5] sm:$0xff]
    %v62 = vld [vmem:[#allocation5 + $0x8] sm:$0xff]
    %v63 = vld [vmem:[#allocation5 + $0x10] sm:$0xff]
    %v64 = vld [vmem:[#allocation5 + $0x18] sm:$0xff]
    %v65 = vld [vmem:[%s2] sm:$0x1]
    %v67 = vlaneseq
    %v68 = vshrl.u32 %v67, 7
    %v69 = vsub.s32 0, %v68
    %v70 = vrot.slane %v65, %v69
    %vm72 = vcmask 261120
    %v74 = vsel %vm72, %v60, 0
    %76 = vmatprep.subr.mxu0 0.0
    %77 = vmatpush1.msra.mxu0 %v61
    %78 = vmatprep.subr.mxu0 0.0
    %79 = vmatpush1.msra.mxu0 %v62
    %80 = vmatprep.subr.mxu0 0.0
    %81 = vmatpush1.msra.mxu0 %v63
    %82 = vmatprep.subr.mxu0 0.0
    %83 = vmatpush1.msra.mxu0 %v64
    %84 = vmatprep.subr.mxu0 0.0
    %85 = vmatpush1.msra.mxu0 0.0
    %86 = vmatprep.subr.mxu0 0.0
    %87 = vmatpush1.msra.mxu0 0.0
    %88 = vmatprep.subr.mxu0 0.0
    %89 = vmatpush1.msra.mxu0 0.0
    %90 = vmatprep.subr.mxu0 0.0
    %91 = vmatpush1.msra.mxu0 0.0
    %92 = vmatprep.subr.mxu0 0.0
    %93 = vmatpush1.msra.mxu0 0.0
    %94 = vmatprep.subr.mxu0 0.0
    %95 = vmatpush1.msra.mxu0 0.0
    %96 = vmatprep.subr.mxu0 0.0
    %97 = vmatpush1.msra.mxu0 0.0
    %98 = vmatprep.subr.mxu0 0.0
    %99 = vmatpush1.msra.mxu0 0.0
    %100 = vmatprep.subr.mxu0 0.0
    %101 = vmatpush1.msra.mxu0 0.0
    %102 = vmatprep.subr.mxu0 0.0
    %103 = vmatpush1.msra.mxu0 0.0
    %104 = vmatprep.subr.mxu0 0.0
    %105 = vmatpush1.msra.mxu0 0.0
    %106 = vmatprep.subr.mxu0 0.0
    %107 = vmatpush1.msra.mxu0 0.0
    %108 = vmatprep.subr.mxu0 0.0
    %109 = vmatpush1.msra.mxu0 0.0
    %110 = vmatprep.subr.mxu0 0.0
    %111 = vmatpush1.msra.mxu0 0.0
    %112 = vmatprep.subr.mxu0 0.0
    %113 = vmatpush1.msra.mxu0 0.0
    %114 = vmatprep.subr.mxu0 0.0
    %115 = vmatpush1.msra.mxu0 0.0
    %116 = vmatprep.subr.mxu0 0.0
    %117 = vmatpush1.msra.mxu0 0.0
    %118 = vmatprep.subr.mxu0 0.0
    %119 = vmatpush1.msra.mxu0 0.0
    %120 = vmatprep.subr.mxu0 0.0
    %121 = vmatpush1.msra.mxu0 0.0
    %122 = vmatprep.subr.mxu0 0.0
    %123 = vmatpush1.msra.mxu0 0.0
    %124 = vmatprep.subr.mxu0 0.0
    %125 = vmatpush1.msra.mxu0 0.0
    %126 = vmatprep.subr.mxu0 0.0
    %127 = vmatpush1.msra.mxu0 0.0
    %128 = vmatprep.subr.mxu0 0.0
    %129 = vmatpush1.msra.mxu0 0.0
    %130 = vmatprep.subr.mxu0 0.0
    %131 = vmatpush1.msra.mxu0 0.0
    %132 = vmatprep.subr.mxu0 0.0
    %133 = vmatpush1.msra.mxu0 0.0
    %134 = vmatprep.subr.mxu0 0.0
    %135 = vmatpush1.msra.mxu0 0.0
    %136 = vmatprep.subr.mxu0 0.0
    %137 = vmatpush1.msra.mxu0 0.0
    %138 = vmatprep.subr.mxu0 0.0
    %139 = vmatpush1.msra.mxu0 0.0
    %140 = vmatprep.mubr.f32.mxu0 0.0
    %141 = vmatmul.mubr.f32.gmra.mrb[0].mxu0 %v74
    %v142 = vpop.f32.mrb[0].mxu0
    %v143 = vadd.f32 %v70, %v142
    %v144 = vpop.f32.mrb[0].mxu0
    %145 = vdwg.mxu0
    %v146 = vmax.f32 %v143, 0.0
    %v147 = vld [vmem:[#allocation7] sm:$0xff]
    %v148 = vld [vmem:[#allocation7 + $0x8] sm:$0xff]
    %v149 = vld [vmem:[#allocation7 + $0x10] sm:$0xff]
    %v150 = vld [vmem:[#allocation7 + $0x18] sm:$0xff]
    %v151 = vld [vmem:[#allocation7 + $0x20] sm:$0xff]
    %v152 = vld [vmem:[#allocation7 + $0x28] sm:$0xff]
    %v153 = vld [vmem:[#allocation7 + $0x30] sm:$0xff]
    %v154 = vld [vmem:[#allocation7 + $0x38] sm:$0xff]
    %v155 = vld [vmem:[#allocation7 + $0x40] sm:$0xff]
    %v156 = vld [vmem:[#allocation7 + $0x48] sm:$0xff]
    %v157 = vld [vmem:[#allocation7 + $0x50] sm:$0xff]
    %v158 = vld [vmem:[#allocation7 + $0x58] sm:$0xff]
    %v159 = vld [vmem:[#allocation7 + $0x60] sm:$0xff]
    %v160 = vld [vmem:[#allocation7 + $0x68] sm:$0xff]
    %v161 = vld [vmem:[#allocation7 + $0x70] sm:$0xff]
    %v162 = vld [vmem:[#allocation7 + $0x78] sm:$0xff]
    %v163 = vld [vmem:[%s4] sm:$0x1]
    %v165 = vlaneseq
    %v166 = vshrl.u32 %v165, 7
    %v167 = vsub.s32 0, %v166
    %v168 = vrot.slane %v163, %v167
    %170 = vmatprep.subr.mxu0 0.0
    %171 = vmatpush1.msra.mxu0 %v147
    %172 = vmatprep.subr.mxu0 0.0
    %173 = vmatpush1.msra.mxu0 %v148
    %174 = vmatprep.subr.mxu0 0.0
    %175 = vmatpush1.msra.mxu0 %v149
    %176 = vmatprep.subr.mxu0 0.0
    %177 = vmatpush1.msra.mxu0 %v150
    %178 = vmatprep.subr.mxu0 0.0
    %179 = vmatpush1.msra.mxu0 %v151
    %180 = vmatprep.subr.mxu0 0.0
    %181 = vmatpush1.msra.mxu0 %v152
    %182 = vmatprep.subr.mxu0 0.0
    %183 = vmatpush1.msra.mxu0 %v153
    %184 = vmatprep.subr.mxu0 0.0
    %185 = vmatpush1.msra.mxu0 %v154
    %186 = vmatprep.subr.mxu0 0.0
    %187 = vmatpush1.msra.mxu0 %v155
    %188 = vmatprep.subr.mxu0 0.0
    %189 = vmatpush1.msra.mxu0 %v156
    %190 = vmatprep.subr.mxu0 0.0
    %191 = vmatpush1.msra.mxu0 %v157
    %192 = vmatprep.subr.mxu0 0.0
    %193 = vmatpush1.msra.mxu0 %v158
    %194 = vmatprep.subr.mxu0 0.0
    %195 = vmatpush1.msra.mxu0 %v159
    %196 = vmatprep.subr.mxu0 0.0
    %197 = vmatpush1.msra.mxu0 %v160
    %198 = vmatprep.subr.mxu0 0.0
    %199 = vmatpush1.msra.mxu0 %v161
    %200 = vmatprep.subr.mxu0 0.0
    %201 = vmatpush1.msra.mxu0 %v162
    %202 = vmatprep.subr.mxu0 0.0
    %203 = vmatpush1.msra.mxu0 0.0
    %204 = vmatprep.subr.mxu0 0.0
    %205 = vmatpush1.msra.mxu0 0.0
    %206 = vmatprep.subr.mxu0 0.0
    %207 = vmatpush1.msra.mxu0 0.0
    %208 = vmatprep.subr.mxu0 0.0
    %209 = vmatpush1.msra.mxu0 0.0
    %210 = vmatprep.subr.mxu0 0.0
    %211 = vmatpush1.msra.mxu0 0.0
    %212 = vmatprep.subr.mxu0 0.0
    %213 = vmatpush1.msra.mxu0 0.0
    %214 = vmatprep.subr.mxu0 0.0
    %215 = vmatpush1.msra.mxu0 0.0
    %216 = vmatprep.subr.mxu0 0.0
    %217 = vmatpush1.msra.mxu0 0.0
    %218 = vmatprep.subr.mxu0 0.0
    %219 = vmatpush1.msra.mxu0 0.0
    %220 = vmatprep.subr.mxu0 0.0
    %221 = vmatpush1.msra.mxu0 0.0
    %222 = vmatprep.subr.mxu0 0.0
    %223 = vmatpush1.msra.mxu0 0.0
    %224 = vmatprep.subr.mxu0 0.0
    %225 = vmatpush1.msra.mxu0 0.0
    %226 = vmatprep.subr.mxu0 0.0
    %227 = vmatpush1.msra.mxu0 0.0
    %228 = vmatprep.subr.mxu0 0.0
    %229 = vmatpush1.msra.mxu0 0.0
    %230 = vmatprep.subr.mxu0 0.0
    %231 = vmatpush1.msra.mxu0 0.0
    %232 = vmatprep.subr.mxu0 0.0
    %233 = vmatpush1.msra.mxu0 0.0
    %234 = vmatprep.mubr.f32.mxu0 0.0
    %235 = vmatmul.mubr.f32.gmra.mrb[0].mxu0 %v146
    %v236 = vpop.f32.mrb[0].mxu0
    %v237 = vadd.f32 %v168, %v236
    %v238 = vpop.f32.mrb[0].mxu0
    %239 = vdwg.mxu0
    %v240 = vlaneseq
    %v241 = vand.u32 %v240, 127
    %vm242 = vcmp.lt.s32.totalorder %v241, 4
    %vm243 = vcmp.eq.s32.totalorder %v241, 4
    %v244 = vsel %vm243, 1, 0
    %v245 = vcvt.s32.f32 %v244
    %v246 = vsel %vm242, 1, 0
    %vm247 = vcmp.eq.s32.totalorder %v246, 1
    %v248 = vsel %vm247, %v237, -1e+30
    %249 = vmax.xlane.f32.xlu0 %v248
    %v250 = vpop.xlane.xlu0 %249
    %v251 = vsub.f32 %v237, %v250
    %v252 = vmul.f32 %v251, 1.442695
    %v253 = vpow.pop %v252
    %v254 = vsel %vm247, %v253, 0.0
    %255 = vadd.xlane.f32.xlu0 %v254
    %v256 = vpop.xlane.xlu0 %255
    %v257 = vrcp.pop %v256
    %v258 = vmul.f32 %v254, %v257
    %v259 = vmul.f32 %v237, %v245
    %v260 = vadd.f32 %v258, %v259
    %261 = vst [vmem:[#allocation8] sm:$0xff] %v260
    // Predicated region
    $region34: #{tpu_custom_call.1} parent=1 // pred_check
      _
    $region35: #{tpu_custom_call.1} parent=1 // pred_check_branch
      %263 = sbr.rel (0) target = $region37
    $region36: #{tpu_custom_call.1} parent=1 // pred_region
      %s265 = ssub.s32 128, 128
      %266 = vsyncadd [#allocation4], %s265
      %s268 = sshll.u32 [#allocation8], 4
      %s269 = int_to_ptr.vmem [resolvable:$true] %s268
      %271 = dma.vmem_to_hbm [thread:$0]  %s269, 128, %s5, [#allocation4]
    $region37: #{tpu_custom_call.1} parent=1 // pred_fallthru
      _
    // Predicated region
    $region38: #{tpu_custom_call.1} parent=1 // pred_check
      _
    $region39: #{tpu_custom_call.1} parent=1 // pred_check_branch
      %273 = sbr.rel (0) target = $region41
    $region40: #{tpu_custom_call.1} parent=1 // pred_region
      %274 = dma.done [#allocation4], 128
    $region41: #{tpu_custom_call.1} parent=1 // pred_fallthru
      _
    %275 = vsyncpa [#allocation3], 1
    %276 = vsyncpa [#allocation6], 1
    %277 = vsyncpa [#allocation4], 1

</llo_original>
